<compile_context>
chip_gen: v5e
topology: v5e:2x2
jax: 0.10.0
libtpu: 0.0.40
codegen_flags: <defaults>
</compile_context>

<pallas_src>
import jax
import jax.numpy as jnp
from jax.experimental import pallas as pl
from jax.experimental.pallas import tpu as pltpu

EPS = 1e-5                       # nn.BatchNorm2d default
NCORES = 2                       # phase-1 stats split (v7x: 2 TCs; harmless on 1-TC chips)
VMEM_LIMIT = 48 * 1024 * 1024    # <= v7x 64 MiB physical VMEM; generous for these tiles


def _round_up(x, m):
    return (x + m - 1) // m * m


def _gram_kernel(xcolT_ref, g_ref):
    """Accumulate G += X @ X^T for this column tile (X = (CK_AUG, TILE_M) bf16)."""
    @pl.when(pl.program_id(1) == 0)
    def _():
        g_ref[...] = jnp.zeros_like(g_ref)

    x = xcolT_ref[...]
    # Contract the lane (M) dim of both operands -> (CK_AUG, CK_AUG) on the MXU.
    g_ref[...] += jax.lax.dot_general(
        x, x, (((1,), (1,)), ((), ())), preferred_element_type=jnp.float32)


def _apply_kernel(xcolT_ref, w_ref, scale_ref, shift_ref, out_ref):
    """y^T = W^T @ Xcol^T  ->  folded BN FMA  ->  ReLU, for one column tile."""
    y = jnp.dot(w_ref[...], xcolT_ref[...], preferred_element_type=jnp.float32)
    out_ref[...] = jnp.maximum(y * scale_ref[...] + shift_ref[...], 0.0
                               ).astype(out_ref.dtype)


def temporal_block(x, w, b, gamma, beta, stride, *, tile_m=8192):
    """x: (N, Cin, H, W) f32; w: (Cout, Cin, K, 1); b/gamma/beta: (Cout,)."""
    del b  # conv bias is a mathematical no-op under training-mode BatchNorm

    N, Cin, H, W = x.shape
    Cout, _, K, _ = w.shape
    Hout = (H - K) // stride + 1
    M = N * Hout * W

    CK = Cin * K
    ONES_ROW = CK                        # index of the appended all-ones row
    CK_AUG = _round_up(CK + 1, 16)       # bf16 sublane packing for the MXU operand
    C_SUB = _round_up(Cout, 8)           # output sublane dim (no 128-lane padding)

    # Lanes carry the M axis, so TILE_M must be a multiple of 128.
    TILE_M = max(128, min(_round_up(tile_m, 128), _round_up(M, 128)))
    M_pad = _round_up(M, NCORES * TILE_M)
    n_tiles = M_pad // TILE_M
    tiles_per_core = n_tiles // NCORES

    # ---- im2col glue, built TRANSPOSED (CK_AUG, M_pad) in bf16 --------------
    # TODO(synk): read x directly inside the kernel (K strided loads per tile)
    # to avoid materializing this K-times-duplicated matrix in HBM.
    cols = [x[:, :, k: k + stride * (Hout - 1) + 1: stride, :] for k in range(K)]
    xk = jnp.stack(cols, axis=2)                                   # (N,Cin,K,Hout,W)
    xcolT = jnp.transpose(xk, (1, 2, 0, 3, 4)).reshape(CK, M)      # (Cin*K, M)
    ones = jnp.ones((1, M), xcolT.dtype)                           # -> colsums live in G
    xcolT = jnp.concatenate([xcolT, ones], axis=0)                 # (CK+1, M)
    xcolT = jnp.pad(xcolT, ((0, CK_AUG - (CK + 1)), (0, M_pad - M))
                    ).astype(jnp.bfloat16)

    w_matT = w[:, :, :, 0].reshape(Cout, CK)                       # (Cout, Cin*K)
    w_matT = jnp.pad(w_matT, ((0, C_SUB - Cout), (0, CK_AUG - CK))
                     ).astype(jnp.bfloat16)

    xcol_bytes = xcolT.size * 2

    # ---- phase 1: per-core partial Gram matrices of the im2col columns ------
    g_parts = pl.pallas_call(
        _gram_kernel,
        out_shape=jax.ShapeDtypeStruct((NCORES, CK_AUG, CK_AUG), jnp.float32),
        grid=(NCORES, tiles_per_core),
        in_specs=[pl.BlockSpec((CK_AUG, TILE_M),
                               lambda c, i: (0, c * tiles_per_core + i))],
        out_specs=pl.BlockSpec((None, CK_AUG, CK_AUG), lambda c, i: (c, 0, 0)),
        compiler_params=pltpu.CompilerParams(
            dimension_semantics=("parallel", "arbitrary"),
            vmem_limit_bytes=VMEM_LIMIT),
        cost_estimate=pl.CostEstimate(
            flops=2 * M_pad * CK_AUG * CK_AUG, transcendentals=0,
            bytes_accessed=xcol_bytes + NCORES * CK_AUG * CK_AUG * 4),
    )(xcolT)

    # ---- BN fold, hoisted out of the per-tile loop (tiny XLA math) ----------
    w_f32 = w_matT.astype(jnp.float32)              # bf16-rounded weights, for consistency
    G = jnp.sum(g_parts, axis=0)                    # (CK_AUG, CK_AUG)
    colsum = G[ONES_ROW]                            # per-column sums of Xcol
    s1 = w_f32 @ colsum                             # sum_m y[m, c]
    s2 = jnp.einsum('ci,ij,cj->c', w_f32, G, w_f32)  # sum_m y[m, c]^2
    inv_m = 1.0 / M                                 # padded columns contribute nothing
    mean = s1 * inv_m
    # One-pass E[y^2] - E[y]^2 (clamped at 0); fine for BN, loses digits at huge M.
    var = jnp.maximum(s2 * inv_m - mean * mean, 0.0)
    gamma_p = jnp.pad(gamma.astype(jnp.float32), (0, C_SUB - Cout))
    beta_p = jnp.pad(beta.astype(jnp.float32), (0, C_SUB - Cout))
    scale_v = gamma_p * jax.lax.rsqrt(var + EPS)
    shift_v = beta_p - mean * scale_v
    scale = scale_v.reshape(C_SUB, 1)
    shift = shift_v.reshape(C_SUB, 1)

    # ---- phase 2: matmul + folded BN FMA + ReLU; column tiles independent ---
    out2dT = pl.pallas_call(
        _apply_kernel,
        out_shape=jax.ShapeDtypeStruct((C_SUB, M_pad), jnp.float32),
        grid=(n_tiles,),
        in_specs=[
            pl.BlockSpec((CK_AUG, TILE_M), lambda i: (0, i)),
            pl.BlockSpec((C_SUB, CK_AUG), lambda i: (0, 0)),
            pl.BlockSpec((C_SUB, 1), lambda i: (0, 0)),
            pl.BlockSpec((C_SUB, 1), lambda i: (0, 0)),
        ],
        out_specs=pl.BlockSpec((C_SUB, TILE_M), lambda i: (0, i)),
        compiler_params=pltpu.CompilerParams(
            dimension_semantics=("parallel",),
            vmem_limit_bytes=VMEM_LIMIT),
        cost_estimate=pl.CostEstimate(
            flops=2 * M_pad * CK_AUG * C_SUB, transcendentals=0,
            bytes_accessed=xcol_bytes + w_matT.size * 2
                           + 2 * C_SUB * 4 + M_pad * C_SUB * 4),
    )(xcolT, w_matT, scale, shift)

    # Back to NCHW; slice/transpose now touches only the exact-size output.
    out = out2dT[:Cout, :M].reshape(Cout, N, Hout, W).transpose(1, 0, 2, 3)
    return out


def temporal_block_reference(x, w, b, gamma, beta, stride):
    """Pure-JAX reference mirroring the PyTorch forward (training-mode BN)."""
    y = jax.lax.conv_general_dilated(
        x, w, window_strides=(stride, 1), padding="VALID",
        dimension_numbers=("NCHW", "OIHW", "NCHW"),
        precision=jax.lax.Precision.HIGHEST,
    )
    y = y + b.reshape(1, -1, 1, 1)
    mean = y.mean(axis=(0, 2, 3), keepdims=True)
    var = ((y - mean) ** 2).mean(axis=(0, 2, 3), keepdims=True)
    y_hat = (y - mean) / jnp.sqrt(var + EPS)
    y_hat = y_hat * gamma.reshape(1, -1, 1, 1) + beta.reshape(1, -1, 1, 1)
    return jnp.maximum(y_hat, 0.0)


if __name__ == "__main__":
    # Small NCHW EEG-style shapes consistent with the module.
    N, Cin, H, W = 4, 4, 32, 8
    Cout, K, stride = 16, 3, 2
    Hout = (H - K) // stride + 1

    key = jax.random.PRNGKey(0)
    kx, kw, kb, kg, kbt = jax.random.split(key, 5)

    x = jax.random.normal(kx, (N, Cin, H, W), dtype=jnp.float32)
    w = jax.random.normal(kw, (Cout, Cin, K, 1), dtype=jnp.float32) * 0.1
    b = jax.random.normal(kb, (Cout,), dtype=jnp.float32) * 0.1
    gamma = 1.0 + 0.1 * jax.random.normal(kg, (Cout,), dtype=jnp.float32)
    beta = 0.1 * jax.random.normal(kbt, (Cout,), dtype=jnp.float32)

    # tile_m=128 so this small example still exercises the multi-tile grid, the
    # two-core stats split, the revisited Gram accumulator and padded columns.
    out = temporal_block(x, w, b, gamma, beta, stride, tile_m=128)
    out = jax.block_until_ready(out)

    ref = temporal_block_reference(x, w, b, gamma, beta, stride)
    assert out.shape == (N, Cout, Hout, W), out.shape

    max_err = float(jnp.max(jnp.abs(out - ref)))
    mean_err = float(jnp.mean(jnp.abs(out - ref)))
    # bf16 MXU inputs (f32 accumulation) vs f32 HIGHEST-precision reference.
    assert max_err < 5e-2 and mean_err < 1e-2, (max_err, mean_err)

    print("KERNEL_OK")
</pallas_src>

<mosaic_0001>
module attributes {stable_mosaic.version = 11 : i64} {
  func.func @_gram_kernel(%arg0: i32, %arg1: i32, %arg2: memref<16x128xbf16, #tpu.memory_space<vmem>>, %arg3: memref<1x16x16xf32, #tpu.memory_space<vmem>>) attributes {dimension_semantics = [#tpu.dimension_semantics<parallel>, #tpu.dimension_semantics<arbitrary>], iteration_bounds = array<i64: 2, 2>, scalar_prefetch = 0 : i64, scratch_operands = 0 : i64, tpu.core_type = #tpu.core_type<tc>, window_params = [{transform_indices = @transform_0, window_bounds = array<i64: 16, 128>}, {transform_indices = @transform_1, window_bounds = array<i64: 1, 16, 16>}]} {
    %c0_i32 = arith.constant 0 : i32
    %0 = arith.cmpi eq, %arg1, %c0_i32 : i32
    %1 = arith.extui %0 : i1 to i32
    %c0_i32_0 = arith.constant 0 : i32
    %2 = arith.cmpi ne, %1, %c0_i32_0 : i32
    scf.if %2 {
      %cst_8 = arith.constant 0.000000e+00 : f32
      %11 = vector.broadcast %cst_8 : f32 to vector<16x16xf32>
      %c0_9 = arith.constant 0 : index
      %c0_10 = arith.constant 0 : index
      %c0_11 = arith.constant 0 : index
      %12 = vector.load %arg3[%c0_9, %c0_10, %c0_11] : memref<1x16x16xf32, #tpu.memory_space<vmem>>, vector<1x16x16xf32>
      %13 = vector.shape_cast %12 : vector<1x16x16xf32> to vector<16x16xf32>
      %14 = vector.shape_cast %11 : vector<16x16xf32> to vector<1x16x16xf32>
      tpu.vector_store %arg3[%c0_9, %c0_10, %c0_11], %14 {strides = array<i32>} : memref<1x16x16xf32, #tpu.memory_space<vmem>>, vector<1x16x16xf32>,
    } else {
    }
    %c0 = arith.constant 0 : index
    %c0_1 = arith.constant 0 : index
    %3 = vector.load %arg2[%c0, %c0_1] : memref<16x128xbf16, #tpu.memory_space<vmem>>, vector<16x128xbf16>
    %c0_2 = arith.constant 0 : index
    %c0_3 = arith.constant 0 : index
    %c0_4 = arith.constant 0 : index
    %4 = vector.load %arg3[%c0_2, %c0_3, %c0_4] : memref<1x16x16xf32, #tpu.memory_space<vmem>>, vector<1x16x16xf32>
    %5 = vector.shape_cast %4 : vector<1x16x16xf32> to vector<16x16xf32>
    %cst = arith.constant dense<0.000000e+00> : vector<16x16xf32>
    %6 = tpu.matmul %3, %3, %cst {dimension_numbers = #tpu.dot_dimension_numbers<[1], [1], [0], [0], [0, 0, 1, 0], [], []>} : vector<16x128xbf16>, vector<16x128xbf16>, vector<16x16xf32> -> vector<16x16xf32>
    %7 = arith.addf %5, %6 : vector<16x16xf32>
    %c0_5 = arith.constant 0 : index
    %c0_6 = arith.constant 0 : index
    %c0_7 = arith.constant 0 : index
    %8 = vector.load %arg3[%c0_5, %c0_6, %c0_7] : memref<1x16x16xf32, #tpu.memory_space<vmem>>, vector<1x16x16xf32>
    %9 = vector.shape_cast %8 : vector<1x16x16xf32> to vector<16x16xf32>
    %10 = vector.shape_cast %7 : vector<16x16xf32> to vector<1x16x16xf32>
    tpu.vector_store %arg3[%c0_5, %c0_6, %c0_7], %10 {strides = array<i32>} : memref<1x16x16xf32, #tpu.memory_space<vmem>>, vector<1x16x16xf32>,
    return
  }
  func.func @transform_0(%arg0: i32, %arg1: i32) -> (i32, i32) {
    %c2_i32 = arith.constant 2 : i32
    %0 = arith.muli %arg0, %c2_i32 : i32
    %1 = arith.addi %0, %arg1 : i32
    %c0_i32 = arith.constant 0 : i32
    %c0_i32_0 = arith.constant 0 : i32
    return %c0_i32, %1 : i32, i32
  }
  func.func @transform_1(%arg0: i32, %arg1: i32) -> (i32, i32, i32) {
    %c0_i32 = arith.constant 0 : i32
    %c0_i32_0 = arith.constant 0 : i32
    %c0_i32_1 = arith.constant 0 : i32
    return %arg0, %c0_i32, %c0_i32_0 : i32, i32, i32
  }
}

</mosaic_0001>

<llo_original>
// kernel: tpu_custom_call.1
$region0: #{tpu_custom_call.1}
  #allocation0 [shape = 'u32[]', space=smem, size = 0x4, offset = 0x4, fixed_abs, tag = 'smem constant byte address 0x4 - core index']
  #allocation1 [shape = 'u32[72,128]{1,0:T(1,128)}', space=vmem, size = 0x9000, scoped, tag = 'internal scratch']
  %s0 = inlined_call_operand.hbm [shape: bf16[16,512], index: 0, kind: input, shape index: {}]
  %s1 = inlined_call_operand.hbm [shape: f32[2,16,16], index: 1, kind: output, shape index: {}]
  %s2 = sld [smem:[#allocation0]]
  $region45: #{tpu_custom_call.1} parent=0
    _
  %s4 = ssub.s32 1, %s2
  %s5 = scalar_select 0, %s4, %s2
  $region1: #{tpu_custom_call.1} parent=0
    #allocation2 [shape = 'u8[8192]{0}', space=vmem, size = 0x2000, scoped, tag = 'input window, operand 0']
    #allocation3 [shape = 's32[2]{0}', space=sflag, size = 0x8, scoped, tag = 'scoped memory for tpu_custom_call.1']
    #allocation4 [shape = 's32[2]{0}', space=sflag, size = 0x8, scoped, tag = 'scoped memory for tpu_custom_call.1']
    #allocation5 [shape = 'u8[16384]{0}', space=vmem, size = 0x4000, scoped, tag = 'output window, operand 0']
    %6 = vsyncpa [#allocation3], 0
    %s7 = scalar_lea.sflag [#allocation3], 1
    %8 = vsyncpa %s7, 0
    %9 = vsyncpa [#allocation4], 0
    %s10 = scalar_lea.sflag [#allocation4], 1
    %11 = vsyncpa %s10, 0
    loop: start=0, step=1, limit=6
    $region2: #{tpu_custom_call.1} parent=1 // loop_pre_header
      _
    $region3: #{tpu_custom_call.1} parent=1 // loop_header
      %s13 = sphi 0, %s17
      %p14 = scmp.ge.s32.totalorder %s13, 6
      %s20 = sphi 0, %s32
      %s21 = sphi 0, %s28
      %s22 = sphi 0, %s20
      %s23 = sphi 0, %s21
      %s24 = sphi 0, %s22
      %s25 = sphi 0, %s23
      %s39 = sphi 0, %s41
      %s42 = sphi 0, %s39
      %s43 = sphi 0, %s42
      %s59 = sphi 0, %s43
      %s65 = sphi 0, %s67
      %s68 = sphi 0, %s65
      %s69 = sphi 0, %s68
      %s85 = sphi 0, %s69
    $region4: #{tpu_custom_call.1} parent=1 // loop_header_branch
      %16 = sbr.rel (%p14) target = $region8
    $region5: #{tpu_custom_call.1} parent=1 // loop_body
      %s18 = ssub.s32 %s13, 1
      %s19 = ssub.s32 %s13, 2
      %s26 = sadd.s32 1, %s21
      %p27 = scmp.ge.s32.totalorder %s26, 2
      %s28 = scalar_select %p27, 0, %s26
      %s29 = sadd.s32 1, %s20
      %s30 = scalar_select %p27, %s29, %s20
      %p31 = scmp.ge.s32.totalorder %s30, 2
      %s32 = scalar_select %p31, 0, %s30
      %s33 = smul.u32 %s20, 2
      %s34 = sadd.s32 %s33, %s21
      %s35 = smul.u32 %s32, 2
      %s36 = sadd.s32 %s35, %s28
      %s37 = ssub.s32 %s34, %s36
      %p38 = scmp.eq.s32.totalorder %s37, 0
      %s40 = sadd.s32 %s39, 1
      %s41 = scalar_select %p38, %s39, %s40
      %p44 = pneg %p38
      %p45 = scmp.eq.s32.totalorder %s13, 3
      %p46 = por %p44, %p45
      %p47 = scmp.ne.s32.totalorder %s39, %s42
      %p48 = scmp.eq.s32.totalorder %s13, 0
      %p49 = por %p47, %p48
      %p50 = scmp.ne.s32.totalorder %s39, %s42
      %p51 = scmp.eq.s32.totalorder %s18, 3
      %p52 = por %p50, %p51
      %p53 = scmp.ne.s32.totalorder %s42, %s43
      %p54 = scmp.eq.s32.totalorder %s18, 0
      %p55 = por %p53, %p54
      %p56 = scmp.ne.s32.totalorder %s42, %s43
      %p57 = scmp.eq.s32.totalorder %s19, 3
      %p58 = por %p56, %p57
      %p60 = scmp.ne.s32.totalorder %s43, %s59
      %p61 = scmp.eq.s32.totalorder %s19, 0
      %p62 = por %p60, %p61
      %s63 = ssub.s32 %s20, %s32
      %p64 = scmp.eq.s32.totalorder %s63, 0
      %s66 = sadd.s32 %s65, 1
      %s67 = scalar_select %p64, %s65, %s66
      %p70 = pneg %p64
      %p71 = scmp.eq.s32.totalorder %s13, 3
      %p72 = por %p70, %p71
      %p73 = scmp.ne.s32.totalorder %s65, %s68
      %p74 = scmp.eq.s32.totalorder %s13, 0
      %p75 = por %p73, %p74
      %p76 = scmp.ne.s32.totalorder %s65, %s68
      %p77 = scmp.eq.s32.totalorder %s18, 3
      %p78 = por %p76, %p77
      %p79 = scmp.ne.s32.totalorder %s68, %s69
      %p80 = scmp.eq.s32.totalorder %s18, 0
      %p81 = por %p79, %p80
      %p82 = scmp.ne.s32.totalorder %s68, %s69
      %p83 = scmp.eq.s32.totalorder %s19, 3
      %p84 = por %p82, %p83
      %p86 = scmp.ne.s32.totalorder %s69, %s85
      %p87 = scmp.eq.s32.totalorder %s19, 0
      %p88 = por %p86, %p87
      %p89 = scmp.le.s32.totalorder 1, %s13
      %p90 = scmp.lt.s32.totalorder %s13, 5
      %p91 = pnand %p89, %p90
      %p92 = pneg %p91
      // Predicated region
      $region9: #{tpu_custom_call.1} parent=5 // pred_check
        _
      $region10: #{tpu_custom_call.1} parent=5 // pred_check_branch
        %94 = sbr.rel (%p91) target = $region12
      $region11: #{tpu_custom_call.1} parent=5 // pred_region
        %s95 = ssub.s32 %s13, 1
      $region12: #{tpu_custom_call.1} parent=5 // pred_fallthru
        _
      %p96 = scmp.lt.s32.totalorder %s13, 4
      // Predicated region
      $region13: #{tpu_custom_call.1} parent=5 // pred_check
        %p97 = pneg %p96
      $region14: #{tpu_custom_call.1} parent=5 // pred_check_branch
        %99 = sbr.rel (%p97) target = $region16
      $region15: #{tpu_custom_call.1} parent=5 // pred_region
        // Predicated region
        $region17: #{tpu_custom_call.1} parent=15 // pred_check
          %p100 = pneg %p49
        $region18: #{tpu_custom_call.1} parent=15 // pred_check_branch
          %102 = sbr.rel (%p100) target = $region20
        $region19: #{tpu_custom_call.1} parent=15 // pred_region
          %s103 = sand.u32 %s39, 1
          %s104 = scalar_lea.sflag [#allocation3], %s103
          %s105 = sand.u32 %s39, 1
          %s106 = smul.addr %s105, 8
          %s107 = scalar_lea.vmem [#allocation2], %s106
          %s108 = smul.u32 %s20, 2
          %s109 = sadd.s32 %s108, %s21
          %111 = vsyncadd %s104, 0
          %s112 = smul.addr %s109, 4
          %s113 = scalar_lea.hbm %s0, %s112
          %s114 = sshll.u32 %s113, 4
          %s115 = int_to_ptr.hbm [resolvable:$true] %s114
          %s116 = sshll.u32 %s107, 4
          %s117 = int_to_ptr.vmem [resolvable:$true] %s116
          %122 = dma.hbm_to_vmem [thread:$0]  %s115, 128, %s117, %s104, 256, 64, 4
        $region20: #{tpu_custom_call.1} parent=15 // pred_fallthru
          _
      $region16: #{tpu_custom_call.1} parent=5 // pred_fallthru
        _
      %p123 = scmp.le.s32.totalorder 1, %s13
      %p124 = scmp.lt.s32.totalorder %s13, 5
      %p125 = pnand %p123, %p124
      %p126 = pneg %p125
      // Predicated region
      $region21: #{tpu_custom_call.1} parent=5 // pred_check
        _
      $region22: #{tpu_custom_call.1} parent=5 // pred_check_branch
        %128 = sbr.rel (%p125) target = $region24
      $region23: #{tpu_custom_call.1} parent=5 // pred_region
        %s129 = ssub.s32 %s13, 1
        %s130 = sand.u32 %s42, 1
        %s131 = scalar_lea.sflag [#allocation3], %s130
        %s132 = sand.u32 %s42, 1
        %s133 = smul.addr %s132, 8
        %s134 = scalar_lea.vmem [#allocation2], %s133
        // Predicated region
        $region25: #{tpu_custom_call.1} parent=23 // pred_check
          %p135 = pneg %p55
        $region26: #{tpu_custom_call.1} parent=23 // pred_check_branch
          %137 = sbr.rel (%p135) target = $region28
        $region27: #{tpu_custom_call.1} parent=23 // pred_region
          %139 = dma.done %s131, 128
        $region28: #{tpu_custom_call.1} parent=23 // pred_fallthru
          _
        %s140 = sand.u32 %s42, 1
        %s141 = scalar_lea.sflag [#allocation3], %s140
        %s142 = sand.u32 %s42, 1
        %s143 = smul.addr %s142, 8
        %s144 = scalar_lea.vmem [#allocation2], %s143
        %p145 = pneg %p55
        %p146 = pneg %p52
        %p147 = pneg %p81
        %p148 = pneg %p78
        %s149 = sand.u32 %s68, 1
        %s150 = scalar_lea.sflag [#allocation4], %s149
        %s151 = sand.u32 %s68, 1
        %s152 = smul.addr %s151, 16
        %s153 = scalar_lea.vmem [#allocation5], %s152
        %s154 = smul.u32 %s22, 2
        %s155 = sadd.s32 %s154, %s23
        %p157 = scmp.eq.s32.totalorder %s23, 0
        // Predicated region
        $region29: #{tpu_custom_call.1} parent=23 // pred_check
          %p158 = pneg %p157
        $region30: #{tpu_custom_call.1} parent=23 // pred_check_branch
          %160 = sbr.rel (%p158) target = $region32
        $region31: #{tpu_custom_call.1} parent=23 // pred_region
          %vm161 = vcmask 130048
          %162 = vst.msk [vmem:[%s153] sm:$0xff] %vm161, 0.0
          %163 = vst.msk [vmem:[%s153 + $0x8] sm:$0xff] %vm161, 0.0
        $region32: #{tpu_custom_call.1} parent=23 // pred_fallthru
          _
        %v164 = vld [vmem:[%s134] sm:$0xf]
        %v165 = vld [vmem:[%s134 + $0x4] sm:$0xf]
        %v166 = vld [vmem:[%s153] sm:$0xff]
        %v167 = vld [vmem:[%s153 + $0x8] sm:$0xff]
        %v170 = vunpack.c.l.b16 %v164
        %v171 = vunpack.c.l.b16 %v165
        %v172 = vpack.c.b16 %v171, %v170
        %174 = vmatpush.bf16.xpose.msra.mxu0 0
        %175 = vmatpush.bf16.xpose.msra.mxu0 0
        %176 = vmatpush.bf16.xpose.msra.mxu0 0
        %177 = vmatpush.bf16.xpose.msra.mxu0 0
        %178 = vmatpush.bf16.xpose.msra.mxu0 0
        %179 = vmatpush.bf16.xpose.msra.mxu0 0
        %180 = vmatpush.bf16.xpose.msra.mxu0 0
        %181 = vmatpush.bf16.xpose.msra.mxu0 %v172
        %182 = vmatmul.bf16.gmra.mxu0 %v172
        %v183 = vpop.f32.mrf.mxu0
        %v184 = vadd.f32 0.0, %v183
        %v185 = vpop.f32.mrf.mxu0
        %v186 = vadd.f32 0.0, %v185
        %187 = vdwg.mxu0
        %v188 = vadd.f32 %v166, %v184
        %v189 = vadd.f32 %v167, %v186
        %vm190 = vcmask 130048
        %191 = vst.msk [vmem:[%s153] sm:$0xff] %vm190, %v188
        %192 = vst.msk [vmem:[%s153 + $0x8] sm:$0xff] %vm190, %v189
        %s193 = sand.u32 %s68, 1
        %s194 = scalar_lea.sflag [#allocation4], %s193
        %s195 = sand.u32 %s68, 1
        %s196 = smul.addr %s195, 16
        %s197 = scalar_lea.vmem [#allocation5], %s196
        // Predicated region
        $region33: #{tpu_custom_call.1} parent=23 // pred_check
          %p198 = pneg %p78
        $region34: #{tpu_custom_call.1} parent=23 // pred_check_branch
          %200 = sbr.rel (%p198) target = $region36
        $region35: #{tpu_custom_call.1} parent=23 // pred_region
          %202 = vsyncadd %s194, 0
          %s203 = smul.addr %s22, 2
          %s204 = smul.addr %s203, 8
          %s205 = scalar_lea.hbm %s1, %s204
          %s206 = sshll.u32 %s197, 4
          %s207 = int_to_ptr.vmem [resolvable:$true] %s206
          %s208 = sshll.u32 %s205, 4
          %s209 = int_to_ptr.hbm [resolvable:$true] %s208
          %214 = dma.vmem_to_hbm [thread:$0]  %s207, 256, %s209, %s194, 128, 128, 8
        $region36: #{tpu_custom_call.1} parent=23 // pred_fallthru
          _
      $region24: #{tpu_custom_call.1} parent=5 // pred_fallthru
        _
      %p215 = scmp.le.s32.totalorder 2, %s13
      // Predicated region
      $region37: #{tpu_custom_call.1} parent=5 // pred_check
        %p216 = pneg %p215
      $region38: #{tpu_custom_call.1} parent=5 // pred_check_branch
        %218 = sbr.rel (%p216) target = $region40
      $region39: #{tpu_custom_call.1} parent=5 // pred_region
        %s219 = ssub.s32 %s13, 2
        // Predicated region
        $region41: #{tpu_custom_call.1} parent=39 // pred_check
          %p220 = pneg %p84
        $region42: #{tpu_custom_call.1} parent=39 // pred_check_branch
          %222 = sbr.rel (%p220) target = $region44
        $region43: #{tpu_custom_call.1} parent=39 // pred_region
          %s223 = sand.u32 %s69, 1
          %s224 = scalar_lea.sflag [#allocation4], %s223
          %s225 = sand.u32 %s69, 1
          %s226 = smul.addr %s225, 16
          %s227 = scalar_lea.vmem [#allocation5], %s226
          %229 = dma.done %s224, 256
        $region44: #{tpu_custom_call.1} parent=39 // pred_fallthru
          _
      $region40: #{tpu_custom_call.1} parent=5 // pred_fallthru
        _
    $region6: #{tpu_custom_call.1} parent=1 // loop_footer
      %s17 = sadd.s32 1, %s13
    $region7: #{tpu_custom_call.1} parent=1 // loop_footer_branch
      %12 = sbr.rel target = $region3
    $region8: #{tpu_custom_call.1} parent=1 // loop_exit
      _
    %230 = vsyncpa [#allocation3], 1
    %s231 = scalar_lea.sflag [#allocation3], 1
    %232 = vsyncpa %s231, 1
    %233 = vsyncpa [#allocation4], 1
    %s234 = scalar_lea.sflag [#allocation4], 1
    %235 = vsyncpa %s234, 1

</llo_original>
